<compile_context>
chip_gen: v5e
topology: v5e:2x2
jax: 0.10.0
libtpu: 0.0.40
codegen_flags: <defaults>
</compile_context>

<pallas_src>
import functools

import jax
import jax.numpy as jnp
from jax.experimental import pallas as pl
from jax.experimental.pallas import tpu as pltpu

LANE = 128


def _round_up(n, m):
    return ((n + m - 1) // m) * m


def _vmem_limit_bytes():
    # Generation-aware VMEM limit with headroom (64 MiB physical on v7x).
    try:
        cap = getattr(pltpu.get_tpu_info(), "vmem_capacity_bytes", None)
        if cap:
            return int(cap * 0.85)
    except Exception:
        pass
    return 48 * 1024 * 1024


def _shifted_taps(a, t0, tile, d, seq_len):
    """(tile, Cp) views of `a` at rows t-d and t+d for t in [t0, t0+tile),
    zero-padded at the sequence boundaries.  All indices are Python ints."""
    cp = a.shape[1]
    # prev tap: rows t - d  (zero for t < d)
    zf = min(max(d - t0, 0), tile)
    if zf >= tile:
        prev = jnp.zeros((tile, cp), a.dtype)
    else:
        piece = a[t0 + zf - d: t0 + tile - d]
        prev = piece if zf == 0 else jnp.concatenate(
            [jnp.zeros((zf, cp), a.dtype), piece], axis=0)
    # next tap: rows t + d  (zero for t >= T - d)
    nv = min(max(seq_len - d - t0, 0), tile)
    if nv <= 0:
        nxt = jnp.zeros((tile, cp), a.dtype)
    else:
        piece = a[t0 + d: t0 + d + nv]
        nxt = piece if nv == tile else jnp.concatenate(
            [piece, jnp.zeros((tile - nv, cp), a.dtype)], axis=0)
    return prev, nxt


# ---------------------------------------------------------------------------
# Fused kernel: conv_1x1 + all DilatedResidualLayers for one lane-packed group.
# ---------------------------------------------------------------------------
def _stage_kernel(x_ref, w0_ref, b0_ref, wd_ref, bd_ref, w1_ref, b1_ref, o_ref,
                  *, dilations, seq_len, tiles):
    # Input 1x1 conv: (T, Kin)bf16 @ (Kin, Cp)bf16 -> f32 accumulate.
    a = jnp.dot(x_ref[0], w0_ref[...],
                preferred_element_type=jnp.float32) + b0_ref[...]

    for l, d in enumerate(dilations):
        wd_l = wd_ref[l]                                   # (3Cp, Cp) bf16
        w1_l = w1_ref[l]                                   # (Cp, Cp)  bf16
        bd_l = bd_ref[l]                                   # (1, Cp)   f32
        b1_l = b1_ref[l]                                   # (1, Cp)   f32
        chunks = []
        for (t0, tl) in tiles:                             # static chunk schedule
            mid = a[t0:t0 + tl]                            # (tl, Cp) f32
            prev, nxt = _shifted_taps(a, t0, tl, d, seq_len)
            # Fuse the 3 taps along K: one wide (tl, 3Cp) @ (3Cp, Cp) MXU dot.
            xin = jnp.concatenate([prev, mid, nxt], axis=1).astype(jnp.bfloat16)
            h = jnp.dot(xin, wd_l, preferred_element_type=jnp.float32) + bd_l
            h = jnp.maximum(h, 0.0).astype(jnp.bfloat16)   # ReLU, cast for next dot
            res = jnp.dot(h, w1_l, preferred_element_type=jnp.float32) + b1_l
            # TODO(synk): nn.Dropout treated as identity (inference semantics).
            chunks.append(mid + res)                       # residual add, f32
        a = chunks[0] if len(chunks) == 1 else jnp.concatenate(chunks, axis=0)

    o_ref[0] = a                                           # single final store


# ---------------------------------------------------------------------------
# One-time parameter prep: lane-packing (block-diagonal), padding, bf16 cast.
# ---------------------------------------------------------------------------
def pack_stage_params(params, lane=LANE):
    w0 = jnp.asarray(params["conv1x1_w"], jnp.float32)   # (dim_in, C)
    b0 = jnp.asarray(params["conv1x1_b"], jnp.float32)   # (C,)
    wd = jnp.asarray(params["wd"], jnp.float32)           # (L, 3, C, C)
    bd = jnp.asarray(params["bd"], jnp.float32)           # (L, C)
    w1 = jnp.asarray(params["w1"], jnp.float32)           # (L, C, C)
    b1 = jnp.asarray(params["b1"], jnp.float32)           # (L, C)
    dilations = tuple(int(d) for d in params["dilations"])

    dim_in, C = w0.shape
    L = wd.shape[0]
    pack = max(1, lane // C) if C < lane else 1
    c_pad = _round_up(pack * C, lane)
    k_in = pack * dim_in
    eye = jnp.eye(pack, dtype=jnp.float32)

    def bdiag(w):                      # (ci, co) -> block-diag (pack*ci, pack*co)
        return jnp.kron(eye, w)

    def pad_last(arr, n):
        return jnp.pad(arr, [(0, 0)] * (arr.ndim - 1) + [(0, n - arr.shape[-1])])

    def pad_sq(w):                     # (pack*C, pack*C) -> (c_pad, c_pad)
        return jnp.pad(w, ((0, c_pad - w.shape[0]), (0, c_pad - w.shape[1])))

    w0p = pad_last(bdiag(w0), c_pad).astype(jnp.bfloat16)                  # (k_in, Cp)
    b0p = pad_last(jnp.tile(b0, pack), c_pad).reshape(1, c_pad)            # (1, Cp) f32

    # dilated conv weights stacked along K: [prev; mid; next] -> (L, 3Cp, Cp)
    wdk = jnp.stack([jnp.concatenate([pad_sq(bdiag(wd[l, k])) for k in range(3)], axis=0)
                     for l in range(L)]).astype(jnp.bfloat16)
    bdp = jnp.stack([pad_last(jnp.tile(bd[l], pack), c_pad)
                     for l in range(L)]).reshape(L, 1, c_pad)
    w1p = jnp.stack([pad_sq(bdiag(w1[l])) for l in range(L)]).astype(jnp.bfloat16)
    b1p = jnp.stack([pad_last(jnp.tile(b1[l], pack), c_pad)
                     for l in range(L)]).reshape(L, 1, c_pad)

    return {"w0": w0p, "b0": b0p, "wd": wdk, "bd": bdp, "w1": w1p, "b1": b1p,
            "dilations": dilations, "pack": pack, "c_pad": c_pad, "k_in": k_in,
            "C": C, "dim_in": dim_in, "num_layers": L}


# ---------------------------------------------------------------------------
# Wrapper: lane-pack the batch, single pallas_call for the whole stage.
# ---------------------------------------------------------------------------
def fused_single_stage(x_btc, packed, tile_t=512):
    """x_btc: (B, T, dim_in) f32.  Returns (B, T, C) f32."""
    B, T, dim_in = x_btc.shape
    assert dim_in == packed["dim_in"]
    pack, Cp, C = packed["pack"], packed["c_pad"], packed["C"]
    k_in, L = packed["k_in"], packed["num_layers"]

    G = -(-B // pack)
    Bp = G * pack
    xp = x_btc
    if Bp != B:
        xp = jnp.pad(xp, ((0, Bp - B), (0, 0), (0, 0)))
    # Lane-pack `pack` batch elements and cast to bf16 on the host.
    xp = (xp.reshape(G, pack, T, dim_in).transpose(0, 2, 1, 3)
            .reshape(G, T, k_in).astype(jnp.bfloat16))

    # Static T-chunk schedule (single chunk when T <= tile_t).
    tile_t = max(1, min(int(tile_t), T))
    tiles, t0 = [], 0
    while t0 < T:
        tiles.append((t0, min(tile_t, T - t0)))
        t0 += tile_t
    tiles = tuple(tiles)

    kern = functools.partial(_stage_kernel, dilations=packed["dilations"],
                             seq_len=T, tiles=tiles)

    flops = 2 * G * T * (k_in * Cp + L * (3 * Cp * Cp + Cp * Cp))
    bytes_accessed = (G * T * k_in * 2 + G * T * Cp * 4
                      + k_in * Cp * 2 + L * 4 * Cp * Cp * 2 + (1 + 2 * L) * Cp * 4)

    out_pad = pl.pallas_call(
        kern,
        out_shape=jax.ShapeDtypeStruct((G, T, Cp), jnp.float32),
        grid=(G,),
        in_specs=[
            pl.BlockSpec((1, T, k_in), lambda g: (g, 0, 0)),      # packed input (bf16)
            pl.BlockSpec((k_in, Cp), lambda g: (0, 0)),           # w0 (block-diag, bf16)
            pl.BlockSpec((1, Cp), lambda g: (0, 0)),              # b0
            pl.BlockSpec((L, 3 * Cp, Cp), lambda g: (0, 0, 0)),   # fused 3-tap dilated w
            pl.BlockSpec((L, 1, Cp), lambda g: (0, 0, 0)),        # bd
            pl.BlockSpec((L, Cp, Cp), lambda g: (0, 0, 0)),       # w1
            pl.BlockSpec((L, 1, Cp), lambda g: (0, 0, 0)),        # b1
        ],
        out_specs=pl.BlockSpec((1, T, Cp), lambda g: (g, 0, 0)),
        compiler_params=pltpu.CompilerParams(
            dimension_semantics=("parallel",),
            vmem_limit_bytes=_vmem_limit_bytes(),
        ),
        cost_estimate=pl.CostEstimate(flops=flops, transcendentals=0,
                                      bytes_accessed=bytes_accessed),
    )(xp, packed["w0"], packed["b0"], packed["wd"], packed["bd"],
      packed["w1"], packed["b1"])

    # Un-pack lanes back to (B, T, C).
    out = out_pad[:, :, :pack * C].reshape(G, T, pack, C)
    out = out.transpose(0, 2, 1, 3).reshape(Bp, T, C)
    return out[:B]


# ---------------------------------------------------------------------------
# Parameter construction (mirrors the PyTorch __init__ shapes, stacked per layer)
# ---------------------------------------------------------------------------
def init_params(key, num_layers, num_f_maps, dim_in, num_classes):
    ks = jax.random.split(key, 8)
    s = 0.1
    return {
        "conv1x1_w": s * jax.random.normal(ks[0], (dim_in, num_f_maps), jnp.float32),
        "conv1x1_b": s * jax.random.normal(ks[1], (num_f_maps,), jnp.float32),
        # conv_dilated weights stored as (L, 3, Cin, Cout); tap k multiplies x[t + (k-1)*d]
        "wd": s * jax.random.normal(ks[2], (num_layers, 3, num_f_maps, num_f_maps), jnp.float32),
        "bd": s * jax.random.normal(ks[3], (num_layers, num_f_maps), jnp.float32),
        "w1": s * jax.random.normal(ks[4], (num_layers, num_f_maps, num_f_maps), jnp.float32),
        "b1": s * jax.random.normal(ks[5], (num_layers, num_f_maps), jnp.float32),
        "dilations": tuple(2 ** i for i in range(num_layers)),
        # conv_out / conv_out_2 exist in the PyTorch __init__ but are NOT used in forward().
        "conv_out_w": s * jax.random.normal(ks[6], (num_f_maps, num_classes), jnp.float32),
        "conv_out_b": s * jax.random.normal(ks[7], (num_classes,), jnp.float32),
    }


# ---------------------------------------------------------------------------
# Full forward pass (NCW in / NCW out, like PyTorch)
# ---------------------------------------------------------------------------
def single_stage_model_forward(x_ncw, params, packed=None, tile_t=512):
    """x_ncw: (B, dim_in, T). Returns (B, num_f_maps, T)."""
    if packed is None:
        packed = pack_stage_params(params)        # prefer doing this once, offline
    x_btc = jnp.transpose(x_ncw, (0, 2, 1))       # single entry transpose NCW -> NTC
    out_btc = fused_single_stage(x_btc, packed, tile_t=tile_t)
    return jnp.transpose(out_btc, (0, 2, 1))      # single exit transpose NTC -> NCW


# ---------------------------------------------------------------------------
# Pure-JAX reference (same bf16-operand / f32-accumulate matmul semantics)
# ---------------------------------------------------------------------------
def reference_forward(x_ncw, params):
    def mm(a, w):
        return jnp.dot(a.astype(jnp.bfloat16), w.astype(jnp.bfloat16),
                       preferred_element_type=jnp.float32)

    x = jnp.transpose(x_ncw, (0, 2, 1))           # (B, T, Cin)
    out = mm(x, params["conv1x1_w"]) + params["conv1x1_b"]
    L = params["wd"].shape[0]
    for l in range(L):
        d = int(params["dilations"][l])
        B, T, C = out.shape
        if d < T:
            z = jnp.zeros((B, d, C), out.dtype)
            x_prev = jnp.concatenate([z, out[:, : T - d]], axis=1)
            x_next = jnp.concatenate([out[:, d:], z], axis=1)
        else:
            x_prev = jnp.zeros_like(out)
            x_next = jnp.zeros_like(out)
        h = (mm(x_prev, params["wd"][l, 0]) + mm(out, params["wd"][l, 1])
             + mm(x_next, params["wd"][l, 2]) + params["bd"][l])
        h = jnp.maximum(h, 0.0)
        out = out + mm(h, params["w1"][l]) + params["b1"][l]
    return jnp.transpose(out, (0, 2, 1))


if __name__ == "__main__":
    def check(B, dim_in, T, num_layers, num_f_maps, num_classes, tile_t, seed):
        key = jax.random.PRNGKey(seed)
        key, xkey = jax.random.split(key)
        x = jax.random.normal(xkey, (B, dim_in, T), dtype=jnp.float32)
        params = init_params(key, num_layers, num_f_maps, dim_in, num_classes)
        packed = pack_stage_params(params)     # one-time prep, outside the fwd path
        out = single_stage_model_forward(x, params, packed=packed, tile_t=tile_t)
        out = jax.block_until_ready(out)
        ref = reference_forward(x, params)
        assert out.shape == (B, num_f_maps, T), out.shape
        err = float(jnp.max(jnp.abs(out - ref)))
        assert jnp.allclose(out, ref, atol=2e-2, rtol=2e-2), f"mismatch (max err {err})"

    # Main small config: 2 batch elements lane-packed into 64 of 128 lanes,
    # single T chunk.
    check(B=2, dim_in=16, T=16, num_layers=3, num_f_maps=32, num_classes=6,
          tile_t=512, seed=0)
    # Stress the general paths: multi-chunk T tiling with cross-chunk halos and a
    # ragged last chunk, odd batch (batch padding), non-power-of-2 lane packing
    # (C=24 -> pack=5), and dilations >= T.
    check(B=3, dim_in=10, T=20, num_layers=6, num_f_maps=24, num_classes=5,
          tile_t=8, seed=1)

    print("KERNEL_OK")
</pallas_src>

<mosaic_0001>
module attributes {stable_mosaic.version = 11 : i64} {
  func.func @_stage_kernel(%arg0: i32, %arg1: memref<1x16x64xbf16, #tpu.memory_space<vmem>>, %arg2: memref<64x128xbf16, #tpu.memory_space<vmem>>, %arg3: memref<1x128xf32, #tpu.memory_space<vmem>>, %arg4: memref<3x384x128xbf16, #tpu.memory_space<vmem>>, %arg5: memref<3x1x128xf32, #tpu.memory_space<vmem>>, %arg6: memref<3x128x128xbf16, #tpu.memory_space<vmem>>, %arg7: memref<3x1x128xf32, #tpu.memory_space<vmem>>, %arg8: memref<1x16x128xf32, #tpu.memory_space<vmem>>) attributes {dimension_semantics = [#tpu.dimension_semantics<parallel>], iteration_bounds = array<i64: 1>, scalar_prefetch = 0 : i64, scratch_operands = 0 : i64, tpu.core_type = #tpu.core_type<tc>, window_params = [{transform_indices = @transform_0, window_bounds = array<i64: 1, 16, 64>}, {pipeline_mode = #tpu.pipeline_mode<synchronous>, transform_indices = @transform_1, window_bounds = array<i64: 64, 128>}, {pipeline_mode = #tpu.pipeline_mode<synchronous>, transform_indices = @transform_2, window_bounds = array<i64: 1, 128>}, {pipeline_mode = #tpu.pipeline_mode<synchronous>, transform_indices = @transform_3, window_bounds = array<i64: 3, 384, 128>}, {pipeline_mode = #tpu.pipeline_mode<synchronous>, transform_indices = @transform_4, window_bounds = array<i64: 3, 1, 128>}, {pipeline_mode = #tpu.pipeline_mode<synchronous>, transform_indices = @transform_5, window_bounds = array<i64: 3, 128, 128>}, {pipeline_mode = #tpu.pipeline_mode<synchronous>, transform_indices = @transform_6, window_bounds = array<i64: 3, 1, 128>}, {transform_indices = @transform_7, window_bounds = array<i64: 1, 16, 128>}]} {
    %c0 = arith.constant 0 : index
    %c0_0 = arith.constant 0 : index
    %c0_1 = arith.constant 0 : index
    %0 = vector.load %arg1[%c0, %c0_0, %c0_1] : memref<1x16x64xbf16, #tpu.memory_space<vmem>>, vector<1x16x64xbf16>
    %1 = vector.shape_cast %0 : vector<1x16x64xbf16> to vector<16x64xbf16>
    %c0_2 = arith.constant 0 : index
    %c0_3 = arith.constant 0 : index
    %2 = vector.load %arg2[%c0_2, %c0_3] : memref<64x128xbf16, #tpu.memory_space<vmem>>, vector<64x128xbf16>
    %cst = arith.constant dense<0.000000e+00> : vector<16x128xf32>
    %3 = tpu.matmul %1, %2, %cst {dimension_numbers = #tpu.dot_dimension_numbers<[1], [0], [0], [1], [0, 0, 1, 1], [], []>} : vector<16x64xbf16>, vector<64x128xbf16>, vector<16x128xf32> -> vector<16x128xf32>
    %c0_4 = arith.constant 0 : index
    %c0_5 = arith.constant 0 : index
    %4 = vector.load %arg3[%c0_4, %c0_5] : memref<1x128xf32, #tpu.memory_space<vmem>>, vector<1x128xf32>
    %5 = vector.broadcast %4 : vector<1x128xf32> to vector<16x128xf32>
    %6 = arith.addf %3, %5 : vector<16x128xf32>
    %c0_6 = arith.constant 0 : index
    %c0_7 = arith.constant 0 : index
    %c0_8 = arith.constant 0 : index
    %7 = vector.load %arg4[%c0_6, %c0_7, %c0_8] : memref<3x384x128xbf16, #tpu.memory_space<vmem>>, vector<1x384x128xbf16>
    %8 = vector.shape_cast %7 : vector<1x384x128xbf16> to vector<384x128xbf16>
    %c0_9 = arith.constant 0 : index
    %c0_10 = arith.constant 0 : index
    %c0_11 = arith.constant 0 : index
    %9 = vector.load %arg6[%c0_9, %c0_10, %c0_11] : memref<3x128x128xbf16, #tpu.memory_space<vmem>>, vector<1x128x128xbf16>
    %10 = vector.shape_cast %9 : vector<1x128x128xbf16> to vector<128x128xbf16>
    %c0_12 = arith.constant 0 : index
    %c0_13 = arith.constant 0 : index
    %c0_14 = arith.constant 0 : index
    %11 = vector.load %arg5[%c0_12, %c0_13, %c0_14] : memref<3x1x128xf32, #tpu.memory_space<vmem>>, vector<1x1x128xf32>
    %12 = vector.shape_cast %11 : vector<1x1x128xf32> to vector<1x128xf32>
    %c0_15 = arith.constant 0 : index
    %c0_16 = arith.constant 0 : index
    %c0_17 = arith.constant 0 : index
    %13 = vector.load %arg7[%c0_15, %c0_16, %c0_17] : memref<3x1x128xf32, #tpu.memory_space<vmem>>, vector<1x1x128xf32>
    %14 = vector.shape_cast %13 : vector<1x1x128xf32> to vector<1x128xf32>
    %15 = vector.extract_strided_slice %6 {offsets = [0, 0], sizes = [15, 128], strides = [1, 1]} : vector<16x128xf32> to vector<15x128xf32>
    %cst_18 = arith.constant 0.000000e+00 : f32
    %16 = vector.broadcast %cst_18 : f32 to vector<1x128xf32>
    %17 = tpu.concatenate %16, %15 in 0 : vector<1x128xf32>, vector<15x128xf32> -> vector<16x128xf32>
    %18 = vector.extract_strided_slice %6 {offsets = [1, 0], sizes = [15, 128], strides = [1, 1]} : vector<16x128xf32> to vector<15x128xf32>
    %cst_19 = arith.constant 0.000000e+00 : f32
    %19 = vector.broadcast %cst_19 : f32 to vector<1x128xf32>
    %20 = tpu.concatenate %18, %19 in 0 : vector<15x128xf32>, vector<1x128xf32> -> vector<16x128xf32>
    %21 = tpu.concatenate %17, %6, %20 in 1 : vector<16x128xf32>, vector<16x128xf32>, vector<16x128xf32> -> vector<16x384xf32>
    %22 = arith.truncf %21 : vector<16x384xf32> to vector<16x384xbf16>
    %cst_20 = arith.constant dense<0.000000e+00> : vector<16x128xf32>
    %23 = tpu.matmul %22, %8, %cst_20 {dimension_numbers = #tpu.dot_dimension_numbers<[1], [0], [0], [1], [0, 0, 1, 1], [], []>} : vector<16x384xbf16>, vector<384x128xbf16>, vector<16x128xf32> -> vector<16x128xf32>
    %24 = vector.broadcast %12 : vector<1x128xf32> to vector<16x128xf32>
    %25 = arith.addf %23, %24 : vector<16x128xf32>
    %cst_21 = arith.constant 0.000000e+00 : f32
    %26 = vector.broadcast %cst_21 : f32 to vector<16x128xf32>
    %27 = arith.maximumf %25, %26 : vector<16x128xf32>
    %28 = arith.truncf %27 : vector<16x128xf32> to vector<16x128xbf16>
    %cst_22 = arith.constant dense<0.000000e+00> : vector<16x128xf32>
    %29 = tpu.matmul %28, %10, %cst_22 {dimension_numbers = #tpu.dot_dimension_numbers<[1], [0], [0], [1], [0, 0, 1, 1], [], []>} : vector<16x128xbf16>, vector<128x128xbf16>, vector<16x128xf32> -> vector<16x128xf32>
    %30 = vector.broadcast %14 : vector<1x128xf32> to vector<16x128xf32>
    %31 = arith.addf %29, %30 : vector<16x128xf32>
    %32 = arith.addf %6, %31 : vector<16x128xf32>
    %c1 = arith.constant 1 : index
    %c0_23 = arith.constant 0 : index
    %c0_24 = arith.constant 0 : index
    %33 = vector.load %arg4[%c1, %c0_23, %c0_24] : memref<3x384x128xbf16, #tpu.memory_space<vmem>>, vector<1x384x128xbf16>
    %34 = vector.shape_cast %33 : vector<1x384x128xbf16> to vector<384x128xbf16>
    %c1_25 = arith.constant 1 : index
    %c0_26 = arith.constant 0 : index
    %c0_27 = arith.constant 0 : index
    %35 = vector.load %arg6[%c1_25, %c0_26, %c0_27] : memref<3x128x128xbf16, #tpu.memory_space<vmem>>, vector<1x128x128xbf16>
    %36 = vector.shape_cast %35 : vector<1x128x128xbf16> to vector<128x128xbf16>
    %c1_28 = arith.constant 1 : index
    %c0_29 = arith.constant 0 : index
    %c0_30 = arith.constant 0 : index
    %37 = vector.load %arg5[%c1_28, %c0_29, %c0_30] : memref<3x1x128xf32, #tpu.memory_space<vmem>>, vector<1x1x128xf32>
    %38 = vector.shape_cast %37 : vector<1x1x128xf32> to vector<1x128xf32>
    %c1_31 = arith.constant 1 : index
    %c0_32 = arith.constant 0 : index
    %c0_33 = arith.constant 0 : index
    %39 = vector.load %arg7[%c1_31, %c0_32, %c0_33] : memref<3x1x128xf32, #tpu.memory_space<vmem>>, vector<1x1x128xf32>
    %40 = vector.shape_cast %39 : vector<1x1x128xf32> to vector<1x128xf32>
    %41 = vector.extract_strided_slice %32 {offsets = [0, 0], sizes = [14, 128], strides = [1, 1]} : vector<16x128xf32> to vector<14x128xf32>
    %cst_34 = arith.constant 0.000000e+00 : f32
    %42 = vector.broadcast %cst_34 : f32 to vector<2x128xf32>
    %43 = tpu.concatenate %42, %41 in 0 : vector<2x128xf32>, vector<14x128xf32> -> vector<16x128xf32>
    %44 = vector.extract_strided_slice %32 {offsets = [2, 0], sizes = [14, 128], strides = [1, 1]} : vector<16x128xf32> to vector<14x128xf32>
    %cst_35 = arith.constant 0.000000e+00 : f32
    %45 = vector.broadcast %cst_35 : f32 to vector<2x128xf32>
    %46 = tpu.concatenate %44, %45 in 0 : vector<14x128xf32>, vector<2x128xf32> -> vector<16x128xf32>
    %47 = tpu.concatenate %43, %32, %46 in 1 : vector<16x128xf32>, vector<16x128xf32>, vector<16x128xf32> -> vector<16x384xf32>
    %48 = arith.truncf %47 : vector<16x384xf32> to vector<16x384xbf16>
    %cst_36 = arith.constant dense<0.000000e+00> : vector<16x128xf32>
    %49 = tpu.matmul %48, %34, %cst_36 {dimension_numbers = #tpu.dot_dimension_numbers<[1], [0], [0], [1], [0, 0, 1, 1], [], []>} : vector<16x384xbf16>, vector<384x128xbf16>, vector<16x128xf32> -> vector<16x128xf32>
    %50 = vector.broadcast %38 : vector<1x128xf32> to vector<16x128xf32>
    %51 = arith.addf %49, %50 : vector<16x128xf32>
    %cst_37 = arith.constant 0.000000e+00 : f32
    %52 = vector.broadcast %cst_37 : f32 to vector<16x128xf32>
    %53 = arith.maximumf %51, %52 : vector<16x128xf32>
    %54 = arith.truncf %53 : vector<16x128xf32> to vector<16x128xbf16>
    %cst_38 = arith.constant dense<0.000000e+00> : vector<16x128xf32>
    %55 = tpu.matmul %54, %36, %cst_38 {dimension_numbers = #tpu.dot_dimension_numbers<[1], [0], [0], [1], [0, 0, 1, 1], [], []>} : vector<16x128xbf16>, vector<128x128xbf16>, vector<16x128xf32> -> vector<16x128xf32>
    %56 = vector.broadcast %40 : vector<1x128xf32> to vector<16x128xf32>
    %57 = arith.addf %55, %56 : vector<16x128xf32>
    %58 = arith.addf %32, %57 : vector<16x128xf32>
    %c2 = arith.constant 2 : index
    %c0_39 = arith.constant 0 : index
    %c0_40 = arith.constant 0 : index
    %59 = vector.load %arg4[%c2, %c0_39, %c0_40] : memref<3x384x128xbf16, #tpu.memory_space<vmem>>, vector<1x384x128xbf16>
    %60 = vector.shape_cast %59 : vector<1x384x128xbf16> to vector<384x128xbf16>
    %c2_41 = arith.constant 2 : index
    %c0_42 = arith.constant 0 : index
    %c0_43 = arith.constant 0 : index
    %61 = vector.load %arg6[%c2_41, %c0_42, %c0_43] : memref<3x128x128xbf16, #tpu.memory_space<vmem>>, vector<1x128x128xbf16>
    %62 = vector.shape_cast %61 : vector<1x128x128xbf16> to vector<128x128xbf16>
    %c2_44 = arith.constant 2 : index
    %c0_45 = arith.constant 0 : index
    %c0_46 = arith.constant 0 : index
    %63 = vector.load %arg5[%c2_44, %c0_45, %c0_46] : memref<3x1x128xf32, #tpu.memory_space<vmem>>, vector<1x1x128xf32>
    %64 = vector.shape_cast %63 : vector<1x1x128xf32> to vector<1x128xf32>
    %c2_47 = arith.constant 2 : index
    %c0_48 = arith.constant 0 : index
    %c0_49 = arith.constant 0 : index
    %65 = vector.load %arg7[%c2_47, %c0_48, %c0_49] : memref<3x1x128xf32, #tpu.memory_space<vmem>>, vector<1x1x128xf32>
    %66 = vector.shape_cast %65 : vector<1x1x128xf32> to vector<1x128xf32>
    %67 = vector.extract_strided_slice %58 {offsets = [0, 0], sizes = [12, 128], strides = [1, 1]} : vector<16x128xf32> to vector<12x128xf32>
    %cst_50 = arith.constant 0.000000e+00 : f32
    %68 = vector.broadcast %cst_50 : f32 to vector<4x128xf32>
    %69 = tpu.concatenate %68, %67 in 0 : vector<4x128xf32>, vector<12x128xf32> -> vector<16x128xf32>
    %70 = vector.extract_strided_slice %58 {offsets = [4, 0], sizes = [12, 128], strides = [1, 1]} : vector<16x128xf32> to vector<12x128xf32>
    %cst_51 = arith.constant 0.000000e+00 : f32
    %71 = vector.broadcast %cst_51 : f32 to vector<4x128xf32>
    %72 = tpu.concatenate %70, %71 in 0 : vector<12x128xf32>, vector<4x128xf32> -> vector<16x128xf32>
    %73 = tpu.concatenate %69, %58, %72 in 1 : vector<16x128xf32>, vector<16x128xf32>, vector<16x128xf32> -> vector<16x384xf32>
    %74 = arith.truncf %73 : vector<16x384xf32> to vector<16x384xbf16>
    %cst_52 = arith.constant dense<0.000000e+00> : vector<16x128xf32>
    %75 = tpu.matmul %74, %60, %cst_52 {dimension_numbers = #tpu.dot_dimension_numbers<[1], [0], [0], [1], [0, 0, 1, 1], [], []>} : vector<16x384xbf16>, vector<384x128xbf16>, vector<16x128xf32> -> vector<16x128xf32>
    %76 = vector.broadcast %64 : vector<1x128xf32> to vector<16x128xf32>
    %77 = arith.addf %75, %76 : vector<16x128xf32>
    %cst_53 = arith.constant 0.000000e+00 : f32
    %78 = vector.broadcast %cst_53 : f32 to vector<16x128xf32>
    %79 = arith.maximumf %77, %78 : vector<16x128xf32>
    %80 = arith.truncf %79 : vector<16x128xf32> to vector<16x128xbf16>
    %cst_54 = arith.constant dense<0.000000e+00> : vector<16x128xf32>
    %81 = tpu.matmul %80, %62, %cst_54 {dimension_numbers = #tpu.dot_dimension_numbers<[1], [0], [0], [1], [0, 0, 1, 1], [], []>} : vector<16x128xbf16>, vector<128x128xbf16>, vector<16x128xf32> -> vector<16x128xf32>
    %82 = vector.broadcast %66 : vector<1x128xf32> to vector<16x128xf32>
    %83 = arith.addf %81, %82 : vector<16x128xf32>
    %84 = arith.addf %58, %83 : vector<16x128xf32>
    %c0_55 = arith.constant 0 : index
    %c0_56 = arith.constant 0 : index
    %c0_57 = arith.constant 0 : index
    %85 = vector.load %arg8[%c0_55, %c0_56, %c0_57] : memref<1x16x128xf32, #tpu.memory_space<vmem>>, vector<1x16x128xf32>
    %86 = vector.shape_cast %85 : vector<1x16x128xf32> to vector<16x128xf32>
    %87 = vector.shape_cast %84 : vector<16x128xf32> to vector<1x16x128xf32>
    tpu.vector_store %arg8[%c0_55, %c0_56, %c0_57], %87 {strides = array<i32>} : memref<1x16x128xf32, #tpu.memory_space<vmem>>, vector<1x16x128xf32>,
    return
  }
  func.func @transform_0(%arg0: i32) -> (i32, i32, i32) {
    %c0_i32 = arith.constant 0 : i32
    %c0_i32_0 = arith.constant 0 : i32
    %c0_i32_1 = arith.constant 0 : i32
    return %arg0, %c0_i32, %c0_i32_0 : i32, i32, i32
  }
  func.func @transform_1(%arg0: i32) -> (i32, i32) {
    %c0_i32 = arith.constant 0 : i32
    %c0_i32_0 = arith.constant 0 : i32
    %c0_i32_1 = arith.constant 0 : i32
    return %c0_i32, %c0_i32_0 : i32, i32
  }
  func.func @transform_2(%arg0: i32) -> (i32, i32) {
    %c0_i32 = arith.constant 0 : i32
    %c0_i32_0 = arith.constant 0 : i32
    %c0_i32_1 = arith.constant 0 : i32
    return %c0_i32, %c0_i32_0 : i32, i32
  }
  func.func @transform_3(%arg0: i32) -> (i32, i32, i32) {
    %c0_i32 = arith.constant 0 : i32
    %c0_i32_0 = arith.constant 0 : i32
    %c0_i32_1 = arith.constant 0 : i32
    %c0_i32_2 = arith.constant 0 : i32
    return %c0_i32, %c0_i32_0, %c0_i32_1 : i32, i32, i32
  }
  func.func @transform_4(%arg0: i32) -> (i32, i32, i32) {
    %c0_i32 = arith.constant 0 : i32
    %c0_i32_0 = arith.constant 0 : i32
    %c0_i32_1 = arith.constant 0 : i32
    %c0_i32_2 = arith.constant 0 : i32
    return %c0_i32, %c0_i32_0, %c0_i32_1 : i32, i32, i32
  }
  func.func @transform_5(%arg0: i32) -> (i32, i32, i32) {
    %c0_i32 = arith.constant 0 : i32
    %c0_i32_0 = arith.constant 0 : i32
    %c0_i32_1 = arith.constant 0 : i32
    %c0_i32_2 = arith.constant 0 : i32
    return %c0_i32, %c0_i32_0, %c0_i32_1 : i32, i32, i32
  }
  func.func @transform_6(%arg0: i32) -> (i32, i32, i32) {
    %c0_i32 = arith.constant 0 : i32
    %c0_i32_0 = arith.constant 0 : i32
    %c0_i32_1 = arith.constant 0 : i32
    %c0_i32_2 = arith.constant 0 : i32
    return %c0_i32, %c0_i32_0, %c0_i32_1 : i32, i32, i32
  }
  func.func @transform_7(%arg0: i32) -> (i32, i32, i32) {
    %c0_i32 = arith.constant 0 : i32
    %c0_i32_0 = arith.constant 0 : i32
    %c0_i32_1 = arith.constant 0 : i32
    return %arg0, %c0_i32, %c0_i32_0 : i32, i32, i32
  }
}

</mosaic_0001>

<llo_original>
// kernel: tpu_custom_call.1
$region0: #{tpu_custom_call.1}
  #allocation0 [shape = 'u32[]', space=smem, size = 0x4, offset = 0x4, fixed_abs, tag = 'smem constant byte address 0x4 - core index']
  #allocation1 [shape = 'u32[72,128]{1,0:T(1,128)}', space=vmem, size = 0x9000, scoped, tag = 'internal scratch']
  %s0 = inlined_call_operand.hbm [shape: bf16[1,16,64], index: 0, kind: input, shape index: {}]
  %s1 = inlined_call_operand.hbm [shape: bf16[64,128], index: 1, kind: input, shape index: {}]
  %s2 = inlined_call_operand.hbm [shape: f32[1,128], index: 2, kind: input, shape index: {}]
  %s3 = inlined_call_operand.hbm [shape: bf16[3,384,128], index: 3, kind: input, shape index: {}]
  %s4 = inlined_call_operand.vmem [shape: f32[3,1,128], index: 4, kind: input, shape index: {}]
  %s5 = inlined_call_operand.hbm [shape: bf16[3,128,128], index: 5, kind: input, shape index: {}]
  %s6 = inlined_call_operand.hbm [shape: f32[3,1,128], index: 6, kind: input, shape index: {}]
  %s7 = inlined_call_operand.hbm [shape: f32[1,16,128], index: 7, kind: output, shape index: {}]
  %s8 = sld [smem:[#allocation0]]
  $region62: #{tpu_custom_call.1} parent=0
    _
  %s10 = ssub.s32 1, %s8
  %s11 = scalar_select 0, %s10, %s8
  $region1: #{tpu_custom_call.1} parent=0
    #allocation2 [shape = 'u8[4096]{0}', space=vmem, size = 0x1000, scoped, tag = 'input window, operand 0, single buffered']
    #allocation3 [shape = 's32[1]{0}', space=sflag, size = 0x4, scoped, tag = 'scoped memory for tpu_custom_call.1']
    #allocation4 [shape = 's32[1]{0}', space=sflag, size = 0x4, scoped, tag = 'scoped memory for tpu_custom_call.1']
    #allocation5 [shape = 'u8[16384]{0}', space=vmem, size = 0x4000, scoped, tag = 'input window, operand 1, single buffered']
    #allocation6 [shape = 's32[1]{0}', space=sflag, size = 0x4, scoped, tag = 'scoped memory for tpu_custom_call.1']
    #allocation7 [shape = 'u8[512]{0}', space=vmem, size = 0x400, scoped, tag = 'input window, operand 2, single buffered']
    #allocation8 [shape = 'u8[294912]{0}', space=vmem, size = 0x48000, scoped, tag = 'input window, operand 3, single buffered']
    #allocation9 [shape = 's32[1]{0}', space=sflag, size = 0x4, scoped, tag = 'scoped memory for tpu_custom_call.1']
    #allocation10 [shape = 'u8[98304]{0}', space=vmem, size = 0x18000, scoped, tag = 'input window, operand 5, single buffered']
    #allocation11 [shape = 'u8[1536]{0}', space=vmem, size = 0x800, scoped, tag = 'input window, operand 6, single buffered']
    #allocation12 [shape = 's32[1]{0}', space=sflag, size = 0x4, scoped, tag = 'scoped memory for tpu_custom_call.1']
    #allocation13 [shape = 'u8[8192]{0}', space=vmem, size = 0x2000, scoped, tag = 'output window, operand 0, single buffered']
    %12 = vsyncpa [#allocation3], 0
    %13 = vsyncpa [#allocation6], 0
    %14 = vsyncpa [#allocation9], 0
    %15 = vsyncpa [#allocation12], 0
    %16 = vsyncpa [#allocation4], 0
    // Predicated region
    $region2: #{tpu_custom_call.1} parent=1 // pred_check
      _
    $region3: #{tpu_custom_call.1} parent=1 // pred_check_branch
      %18 = sbr.rel (0) target = $region5
    $region4: #{tpu_custom_call.1} parent=1 // pred_region
      %20 = vsyncadd [#allocation3], 0
      %s21 = sshll.u32 %s0, 4
      %s22 = int_to_ptr.hbm [resolvable:$true] %s21
      %s23 = sshll.u32 [#allocation2], 4
      %s24 = int_to_ptr.vmem [resolvable:$true] %s23
      %29 = dma.hbm_to_vmem [thread:$0]  %s22, 128, %s24, [#allocation3], 64, 64, 4
    $region5: #{tpu_custom_call.1} parent=1 // pred_fallthru
      _
    // Predicated region
    $region6: #{tpu_custom_call.1} parent=1 // pred_check
      _
    $region7: #{tpu_custom_call.1} parent=1 // pred_check_branch
      %31 = sbr.rel (0) target = $region9
    $region8: #{tpu_custom_call.1} parent=1 // pred_region
      %33 = vsyncadd [#allocation6], 0
      %s34 = sshll.u32 %s1, 4
      %s35 = int_to_ptr.hbm [resolvable:$true] %s34
      %s36 = sshll.u32 [#allocation5], 4
      %s37 = int_to_ptr.vmem [resolvable:$true] %s36
      %42 = dma.hbm_to_vmem [thread:$0]  %s35, 512, %s37, [#allocation6], 64, 64, 4
    $region9: #{tpu_custom_call.1} parent=1 // pred_fallthru
      _
    // Predicated region
    $region10: #{tpu_custom_call.1} parent=1 // pred_check
      _
    $region11: #{tpu_custom_call.1} parent=1 // pred_check_branch
      %44 = sbr.rel (0) target = $region13
    $region12: #{tpu_custom_call.1} parent=1 // pred_region
      %46 = vsyncadd [#allocation6], 0
      %s48 = sshll.u32 %s2, 4
      %s49 = int_to_ptr.hbm [resolvable:$true] %s48
      %s50 = sshll.u32 [#allocation7], 4
      %s51 = int_to_ptr.vmem [resolvable:$true] %s50
      %53 = dma.hbm_to_vmem [thread:$0]  %s49, 16, %s51, [#allocation6]
    $region13: #{tpu_custom_call.1} parent=1 // pred_fallthru
      _
    // Predicated region
    $region14: #{tpu_custom_call.1} parent=1 // pred_check
      _
    $region15: #{tpu_custom_call.1} parent=1 // pred_check_branch
      %55 = sbr.rel (0) target = $region17
    $region16: #{tpu_custom_call.1} parent=1 // pred_region
      %57 = vsyncadd [#allocation9], 0
      %s58 = sshll.u32 %s3, 4
      %s59 = int_to_ptr.hbm [resolvable:$true] %s58
      %s60 = sshll.u32 [#allocation8], 4
      %s61 = int_to_ptr.vmem [resolvable:$true] %s60
      %66 = dma.hbm_to_vmem [thread:$0]  %s59, 9216, %s61, [#allocation9], 64, 64, 4
    $region17: #{tpu_custom_call.1} parent=1 // pred_fallthru
      _
    // Predicated region
    $region18: #{tpu_custom_call.1} parent=1 // pred_check
      _
    $region19: #{tpu_custom_call.1} parent=1 // pred_check_branch
      %68 = sbr.rel (0) target = $region21
    $region20: #{tpu_custom_call.1} parent=1 // pred_region
      _
    $region21: #{tpu_custom_call.1} parent=1 // pred_fallthru
      _
    // Predicated region
    $region22: #{tpu_custom_call.1} parent=1 // pred_check
      _
    $region23: #{tpu_custom_call.1} parent=1 // pred_check_branch
      %70 = sbr.rel (0) target = $region25
    $region24: #{tpu_custom_call.1} parent=1 // pred_region
      %72 = vsyncadd [#allocation9], 0
      %s73 = sshll.u32 %s5, 4
      %s74 = int_to_ptr.hbm [resolvable:$true] %s73
      %s75 = sshll.u32 [#allocation10], 4
      %s76 = int_to_ptr.vmem [resolvable:$true] %s75
      %81 = dma.hbm_to_vmem [thread:$0]  %s74, 3072, %s76, [#allocation9], 64, 64, 4
    $region25: #{tpu_custom_call.1} parent=1 // pred_fallthru
      _
    // Predicated region
    $region26: #{tpu_custom_call.1} parent=1 // pred_check
      _
    $region27: #{tpu_custom_call.1} parent=1 // pred_check_branch
      %83 = sbr.rel (0) target = $region29
    $region28: #{tpu_custom_call.1} parent=1 // pred_region
      %85 = vsyncadd [#allocation12], 0
      %s86 = sshll.u32 %s6, 4
      %s87 = int_to_ptr.hbm [resolvable:$true] %s86
      %s88 = sshll.u32 [#allocation11], 4
      %s89 = int_to_ptr.vmem [resolvable:$true] %s88
      %94 = dma.hbm_to_vmem [thread:$0]  %s87, 48, %s89, [#allocation12], 16, 16, 1
    $region29: #{tpu_custom_call.1} parent=1 // pred_fallthru
      _
    // Predicated region
    $region30: #{tpu_custom_call.1} parent=1 // pred_check
      _
    $region31: #{tpu_custom_call.1} parent=1 // pred_check_branch
      %96 = sbr.rel (0) target = $region33
    $region32: #{tpu_custom_call.1} parent=1 // pred_region
      %98 = dma.done [#allocation3], 128
    $region33: #{tpu_custom_call.1} parent=1 // pred_fallthru
      _
    // Predicated region
    $region34: #{tpu_custom_call.1} parent=1 // pred_check
      _
    $region35: #{tpu_custom_call.1} parent=1 // pred_check_branch
      %100 = sbr.rel (0) target = $region37
    $region36: #{tpu_custom_call.1} parent=1 // pred_region
      %102 = dma.done [#allocation6], 512
    $region37: #{tpu_custom_call.1} parent=1 // pred_fallthru
      _
    // Predicated region
    $region38: #{tpu_custom_call.1} parent=1 // pred_check
      _
    $region39: #{tpu_custom_call.1} parent=1 // pred_check_branch
      %104 = sbr.rel (0) target = $region41
    $region40: #{tpu_custom_call.1} parent=1 // pred_region
      %106 = dma.done [#allocation6], 16
    $region41: #{tpu_custom_call.1} parent=1 // pred_fallthru
      _
    // Predicated region
    $region42: #{tpu_custom_call.1} parent=1 // pred_check
      _
    $region43: #{tpu_custom_call.1} parent=1 // pred_check_branch
      %108 = sbr.rel (0) target = $region45
    $region44: #{tpu_custom_call.1} parent=1 // pred_region
      %110 = dma.done [#allocation9], 9216
    $region45: #{tpu_custom_call.1} parent=1 // pred_fallthru
      _
    // Predicated region
    $region46: #{tpu_custom_call.1} parent=1 // pred_check
      _
    $region47: #{tpu_custom_call.1} parent=1 // pred_check_branch
      %112 = sbr.rel (0) target = $region49
    $region48: #{tpu_custom_call.1} parent=1 // pred_region
      %114 = dma.done [#allocation9], 3072
    $region49: #{tpu_custom_call.1} parent=1 // pred_fallthru
      _
    // Predicated region
    $region50: #{tpu_custom_call.1} parent=1 // pred_check
      _
    $region51: #{tpu_custom_call.1} parent=1 // pred_check_branch
      %116 = sbr.rel (0) target = $region53
    $region52: #{tpu_custom_call.1} parent=1 // pred_region
      %118 = dma.done [#allocation12], 48
    $region53: #{tpu_custom_call.1} parent=1 // pred_fallthru
      _
    %v120 = vld [vmem:[#allocation2] sm:$0xf]
    %v121 = vld [vmem:[#allocation2 + $0x4] sm:$0xf]
    %v122 = vld [vmem:[#allocation5] sm:$0xf]
    %v123 = vld [vmem:[#allocation5 + $0x4] sm:$0xf]
    %v124 = vld [vmem:[#allocation5 + $0x8] sm:$0xf]
    %v125 = vld [vmem:[#allocation5 + $0xc] sm:$0xf]
    %v126 = vld [vmem:[#allocation5 + $0x10] sm:$0xf]
    %v127 = vld [vmem:[#allocation5 + $0x14] sm:$0xf]
    %v128 = vld [vmem:[#allocation5 + $0x18] sm:$0xf]
    %v129 = vld [vmem:[#allocation5 + $0x1c] sm:$0xf]
    %v130 = vld [vmem:[#allocation7] sm:$0x1]
    %v132 = vperm.slane %v130, 0
    %v136 = vunpack.c.l.b16 %v120
    %v137 = vunpack.c.l.b16 %v121
    %v138 = vpack.c.b16 %v137, %v136
    %v147 = vunpack.c.l.b16 %v122
    %v148 = vunpack.c.l.b16 %v123
    %v149 = vunpack.c.l.b16 %v124
    %v150 = vunpack.c.l.b16 %v125
    %v151 = vunpack.c.l.b16 %v126
    %v152 = vunpack.c.l.b16 %v127
    %v153 = vunpack.c.l.b16 %v128
    %v154 = vunpack.c.l.b16 %v129
    %v155 = vpack.c.b16 %v148, %v147
    %v156 = vpack.c.b16 %v150, %v149
    %v157 = vpack.c.b16 %v152, %v151
    %v158 = vpack.c.b16 %v154, %v153
    %vm163 = vcmask 523264
    %v165 = vsel %vm163, %v138, 0
    %167 = vmatpush.bf16.msra.mxu0 0
    %168 = vmatpush.bf16.msra.mxu0 0
    %169 = vmatpush.bf16.msra.mxu0 0
    %170 = vmatpush.bf16.msra.mxu0 0
    %171 = vmatpush.bf16.msra.mxu0 %v158
    %172 = vmatpush.bf16.msra.mxu0 %v157
    %173 = vmatpush.bf16.msra.mxu0 %v156
    %174 = vmatpush.bf16.msra.mxu0 %v155
    %175 = vmatmul.bf16.gmra.mxu0 %v165
    %v176 = vpop.f32.mrf.mxu0
    %v177 = vadd.f32 %v132, %v176
    %v178 = vpop.f32.mrf.mxu0
    %v179 = vadd.f32 %v132, %v178
    %180 = vdwg.mxu0
    %v181 = vld [vmem:[#allocation8] sm:$0xf]
    %v182 = vld [vmem:[#allocation8 + $0x4] sm:$0xf]
    %v183 = vld [vmem:[#allocation8 + $0x8] sm:$0xf]
    %v184 = vld [vmem:[#allocation8 + $0xc] sm:$0xf]
    %v185 = vld [vmem:[#allocation8 + $0x10] sm:$0xf]
    %v186 = vld [vmem:[#allocation8 + $0x14] sm:$0xf]
    %v187 = vld [vmem:[#allocation8 + $0x18] sm:$0xf]
    %v188 = vld [vmem:[#allocation8 + $0x1c] sm:$0xf]
    %v189 = vld [vmem:[#allocation8 + $0x20] sm:$0xf]
    %v190 = vld [vmem:[#allocation8 + $0x24] sm:$0xf]
    %v191 = vld [vmem:[#allocation8 + $0x28] sm:$0xf]
    %v192 = vld [vmem:[#allocation8 + $0x2c] sm:$0xf]
    %v193 = vld [vmem:[#allocation8 + $0x30] sm:$0xf]
    %v194 = vld [vmem:[#allocation8 + $0x34] sm:$0xf]
    %v195 = vld [vmem:[#allocation8 + $0x38] sm:$0xf]
    %v196 = vld [vmem:[#allocation8 + $0x3c] sm:$0xf]
    %v197 = vld [vmem:[#allocation8 + $0x40] sm:$0xf]
    %v198 = vld [vmem:[#allocation8 + $0x44] sm:$0xf]
    %v199 = vld [vmem:[#allocation8 + $0x48] sm:$0xf]
    %v200 = vld [vmem:[#allocation8 + $0x4c] sm:$0xf]
    %v201 = vld [vmem:[#allocation8 + $0x50] sm:$0xf]
    %v202 = vld [vmem:[#allocation8 + $0x54] sm:$0xf]
    %v203 = vld [vmem:[#allocation8 + $0x58] sm:$0xf]
    %v204 = vld [vmem:[#allocation8 + $0x5c] sm:$0xf]
    %v205 = vld [vmem:[#allocation8 + $0x60] sm:$0xf]
    %v206 = vld [vmem:[#allocation8 + $0x64] sm:$0xf]
    %v207 = vld [vmem:[#allocation8 + $0x68] sm:$0xf]
    %v208 = vld [vmem:[#allocation8 + $0x6c] sm:$0xf]
    %v209 = vld [vmem:[#allocation8 + $0x70] sm:$0xf]
    %v210 = vld [vmem:[#allocation8 + $0x74] sm:$0xf]
    %v211 = vld [vmem:[#allocation8 + $0x78] sm:$0xf]
    %v212 = vld [vmem:[#allocation8 + $0x7c] sm:$0xf]
    %v213 = vld [vmem:[#allocation8 + $0x80] sm:$0xf]
    %v214 = vld [vmem:[#allocation8 + $0x84] sm:$0xf]
    %v215 = vld [vmem:[#allocation8 + $0x88] sm:$0xf]
    %v216 = vld [vmem:[#allocation8 + $0x8c] sm:$0xf]
    %v217 = vld [vmem:[#allocation8 + $0x90] sm:$0xf]
    %v218 = vld [vmem:[#allocation8 + $0x94] sm:$0xf]
    %v219 = vld [vmem:[#allocation8 + $0x98] sm:$0xf]
    %v220 = vld [vmem:[#allocation8 + $0x9c] sm:$0xf]
    %v221 = vld [vmem:[#allocation8 + $0xa0] sm:$0xf]
    %v222 = vld [vmem:[#allocation8 + $0xa4] sm:$0xf]
    %v223 = vld [vmem:[#allocation8 + $0xa8] sm:$0xf]
    %v224 = vld [vmem:[#allocation8 + $0xac] sm:$0xf]
    %v225 = vld [vmem:[#allocation8 + $0xb0] sm:$0xf]
    %v226 = vld [vmem:[#allocation8 + $0xb4] sm:$0xf]
    %v227 = vld [vmem:[#allocation8 + $0xb8] sm:$0xf]
    %v228 = vld [vmem:[#allocation8 + $0xbc] sm:$0xf]
    %v229 = vld [vmem:[#allocation10] sm:$0xf]
    %v230 = vld [vmem:[#allocation10 + $0x4] sm:$0xf]
    %v231 = vld [vmem:[#allocation10 + $0x8] sm:$0xf]
    %v232 = vld [vmem:[#allocation10 + $0xc] sm:$0xf]
    %v233 = vld [vmem:[#allocation10 + $0x10] sm:$0xf]
    %v234 = vld [vmem:[#allocation10 + $0x14] sm:$0xf]
    %v235 = vld [vmem:[#allocation10 + $0x18] sm:$0xf]
    %v236 = vld [vmem:[#allocation10 + $0x1c] sm:$0xf]
    %v237 = vld [vmem:[#allocation10 + $0x20] sm:$0xf]
    %v238 = vld [vmem:[#allocation10 + $0x24] sm:$0xf]
    %v239 = vld [vmem:[#allocation10 + $0x28] sm:$0xf]
    %v240 = vld [vmem:[#allocation10 + $0x2c] sm:$0xf]
    %v241 = vld [vmem:[#allocation10 + $0x30] sm:$0xf]
    %v242 = vld [vmem:[#allocation10 + $0x34] sm:$0xf]
    %v243 = vld [vmem:[#allocation10 + $0x38] sm:$0xf]
    %v244 = vld [vmem:[#allocation10 + $0x3c] sm:$0xf]
    %v245 = vld [vmem:[%s4] sm:$0x1]
    %v246 = vld [vmem:[#allocation11] sm:$0x1]
    %vm249 = vcmask 1040384
    %v250 = vrot.slane %v177, 7
    %v251 = vrot.slane %v179, 7
    %v252 = vsel %vm249, %v250, %v251
    %v255 = vsel %vm249, 0.0, %v250
    %vm256 = vcmask 1046528
    %v257 = vrot.slane %v177, 1
    %v258 = vrot.slane %v179, 1
    %v259 = vsel %vm256, %v257, %v258
    %v262 = vsel %vm256, %v258, 0.0
    %v263 = vpack.c.bf16 %v252, %v255
    %v264 = vpack.c.bf16 %v179, %v177
    %v265 = vpack.c.bf16 %v262, %v259
    %v267 = vperm.slane %v245, 0
    %v317 = vunpack.c.l.b16 %v181
    %v318 = vunpack.c.l.b16 %v182
    %v319 = vunpack.c.l.b16 %v183
    %v320 = vunpack.c.l.b16 %v184
    %v321 = vunpack.c.l.b16 %v185
    %v322 = vunpack.c.l.b16 %v186
    %v323 = vunpack.c.l.b16 %v187
    %v324 = vunpack.c.l.b16 %v188
    %v325 = vunpack.c.l.b16 %v189
    %v326 = vunpack.c.l.b16 %v190
    %v327 = vunpack.c.l.b16 %v191
    %v328 = vunpack.c.l.b16 %v192
    %v329 = vunpack.c.l.b16 %v193
    %v330 = vunpack.c.l.b16 %v194
    %v331 = vunpack.c.l.b16 %v195
    %v332 = vunpack.c.l.b16 %v196
    %v333 = vunpack.c.l.b16 %v197
    %v334 = vunpack.c.l.b16 %v198
    %v335 = vunpack.c.l.b16 %v199
    %v336 = vunpack.c.l.b16 %v200
    %v337 = vunpack.c.l.b16 %v201
    %v338 = vunpack.c.l.b16 %v202
    %v339 = vunpack.c.l.b16 %v203
    %v340 = vunpack.c.l.b16 %v204
    %v341 = vunpack.c.l.b16 %v205
    %v342 = vunpack.c.l.b16 %v206
    %v343 = vunpack.c.l.b16 %v207
    %v344 = vunpack.c.l.b16 %v208
    %v345 = vunpack.c.l.b16 %v209
    %v346 = vunpack.c.l.b16 %v210
    %v347 = vunpack.c.l.b16 %v211
    %v348 = vunpack.c.l.b16 %v212
    %v349 = vunpack.c.l.b16 %v213
    %v350 = vunpack.c.l.b16 %v214
    %v351 = vunpack.c.l.b16 %v215
    %v352 = vunpack.c.l.b16 %v216
    %v353 = vunpack.c.l.b16 %v217
    %v354 = vunpack.c.l.b16 %v218
    %v355 = vunpack.c.l.b16 %v219
    %v356 = vunpack.c.l.b16 %v220
    %v357 = vunpack.c.l.b16 %v221
    %v358 = vunpack.c.l.b16 %v222
    %v359 = vunpack.c.l.b16 %v223
    %v360 = vunpack.c.l.b16 %v224
    %v361 = vunpack.c.l.b16 %v225
    %v362 = vunpack.c.l.b16 %v226
    %v363 = vunpack.c.l.b16 %v227
    %v364 = vunpack.c.l.b16 %v228
    %v365 = vpack.c.b16 %v318, %v317
    %v366 = vpack.c.b16 %v320, %v319
    %v367 = vpack.c.b16 %v322, %v321
    %v368 = vpack.c.b16 %v324, %v323
    %v369 = vpack.c.b16 %v326, %v325
    %v370 = vpack.c.b16 %v328, %v327
    %v371 = vpack.c.b16 %v330, %v329
    %v372 = vpack.c.b16 %v332, %v331
    %v373 = vpack.c.b16 %v334, %v333
    %v374 = vpack.c.b16 %v336, %v335
    %v375 = vpack.c.b16 %v338, %v337
    %v376 = vpack.c.b16 %v340, %v339
    %v377 = vpack.c.b16 %v342, %v341
    %v378 = vpack.c.b16 %v344, %v343
    %v379 = vpack.c.b16 %v346, %v345
    %v380 = vpack.c.b16 %v348, %v347
    %v381 = vpack.c.b16 %v350, %v349
    %v382 = vpack.c.b16 %v352, %v351
    %v383 = vpack.c.b16 %v354, %v353
    %v384 = vpack.c.b16 %v356, %v355
    %v385 = vpack.c.b16 %v358, %v357
    %v386 = vpack.c.b16 %v360, %v359
    %v387 = vpack.c.b16 %v362, %v361
    %v388 = vpack.c.b16 %v364, %v363
    %413 = vmatpush.bf16.msra.mxu0 %v372
    %414 = vmatpush.bf16.msra.mxu0 %v371
    %415 = vmatpush.bf16.msra.mxu0 %v370
    %416 = vmatpush.bf16.msra.mxu0 %v369
    %417 = vmatpush.bf16.msra.mxu0 %v368
    %418 = vmatpush.bf16.msra.mxu0 %v367
    %419 = vmatpush.bf16.msra.mxu0 %v366
    %420 = vmatpush.bf16.msra.mxu0 %v365
    %421 = vmatmul.bf16.gmra.mxu0 %v263
    %v422 = vpop.f32.mrf.mxu0
    %v423 = vadd.f32 %v267, %v422
    %v424 = vpop.f32.mrf.mxu0
    %v425 = vadd.f32 %v267, %v424
    %426 = vdwg.mxu0
    %427 = vmatpush.bf16.msra.mxu0 %v380
    %428 = vmatpush.bf16.msra.mxu0 %v379
    %429 = vmatpush.bf16.msra.mxu0 %v378
    %430 = vmatpush.bf16.msra.mxu0 %v377
    %431 = vmatpush.bf16.msra.mxu0 %v376
    %432 = vmatpush.bf16.msra.mxu0 %v375
    %433 = vmatpush.bf16.msra.mxu0 %v374
    %434 = vmatpush.bf16.msra.mxu0 %v373
    %435 = vmatmul.bf16.gmra.mxu0 %v264
    %v436 = vpop.f32.mrf.mxu0
    %v437 = vadd.f32 %v423, %v436
    %v438 = vpop.f32.mrf.mxu0
    %v439 = vadd.f32 %v425, %v438
    %440 = vdwg.mxu0
    %441 = vmatpush.bf16.msra.mxu0 %v388
    %442 = vmatpush.bf16.msra.mxu0 %v387
    %443 = vmatpush.bf16.msra.mxu0 %v386
    %444 = vmatpush.bf16.msra.mxu0 %v385
    %445 = vmatpush.bf16.msra.mxu0 %v384
    %446 = vmatpush.bf16.msra.mxu0 %v383
    %447 = vmatpush.bf16.msra.mxu0 %v382
    %448 = vmatpush.bf16.msra.mxu0 %v381
    %449 = vmatmul.bf16.gmra.mxu0 %v265
    %v450 = vpop.f32.mrf.mxu0
    %v451 = vadd.f32 %v437, %v450
    %v452 = vpop.f32.mrf.mxu0
    %v453 = vadd.f32 %v439, %v452
    %454 = vdwg.mxu0
    %v455 = vmax.f32 %v451, 0.0
    %v456 = vmax.f32 %v453, 0.0
    %v457 = vpack.c.bf16 %v456, %v455
    %v459 = vperm.slane %v246, 0
    %v477 = vunpack.c.l.b16 %v229
    %v478 = vunpack.c.l.b16 %v230
    %v479 = vunpack.c.l.b16 %v231
    %v480 = vunpack.c.l.b16 %v232
    %v481 = vunpack.c.l.b16 %v233
    %v482 = vunpack.c.l.b16 %v234
    %v483 = vunpack.c.l.b16 %v235
    %v484 = vunpack.c.l.b16 %v236
    %v485 = vunpack.c.l.b16 %v237
    %v486 = vunpack.c.l.b16 %v238
    %v487 = vunpack.c.l.b16 %v239
    %v488 = vunpack.c.l.b16 %v240
    %v489 = vunpack.c.l.b16 %v241
    %v490 = vunpack.c.l.b16 %v242
    %v491 = vunpack.c.l.b16 %v243
    %v492 = vunpack.c.l.b16 %v244
    %v493 = vpack.c.b16 %v478, %v477
    %v494 = vpack.c.b16 %v480, %v479
    %v495 = vpack.c.b16 %v482, %v481
    %v496 = vpack.c.b16 %v484, %v483
    %v497 = vpack.c.b16 %v486, %v485
    %v498 = vpack.c.b16 %v488, %v487
    %v499 = vpack.c.b16 %v490, %v489
    %v500 = vpack.c.b16 %v492, %v491
    %509 = vmatpush.bf16.msra.mxu0 %v500
    %510 = vmatpush.bf16.msra.mxu0 %v499
    %511 = vmatpush.bf16.msra.mxu0 %v498
    %512 = vmatpush.bf16.msra.mxu0 %v497
    %513 = vmatpush.bf16.msra.mxu0 %v496
    %514 = vmatpush.bf16.msra.mxu0 %v495
    %515 = vmatpush.bf16.msra.mxu0 %v494
    %516 = vmatpush.bf16.msra.mxu0 %v493
    %517 = vmatmul.bf16.gmra.mxu0 %v457
    %v518 = vpop.f32.mrf.mxu0
    %v519 = vadd.f32 %v459, %v518
    %v520 = vpop.f32.mrf.mxu0
    %v521 = vadd.f32 %v459, %v520
    %522 = vdwg.mxu0
    %v523 = vadd.f32 %v177, %v519
    %v524 = vadd.f32 %v179, %v521
    %s525 = scalar_lea.vmem [#allocation8], 192
    %v526 = vld [vmem:[%s525] sm:$0xf]
    %v527 = vld [vmem:[%s525 + $0x4] sm:$0xf]
    %v528 = vld [vmem:[%s525 + $0x8] sm:$0xf]
    %v529 = vld [vmem:[%s525 + $0xc] sm:$0xf]
    %v530 = vld [vmem:[%s525 + $0x10] sm:$0xf]
    %v531 = vld [vmem:[%s525 + $0x14] sm:$0xf]
    %v532 = vld [vmem:[%s525 + $0x18] sm:$0xf]
    %v533 = vld [vmem:[%s525 + $0x1c] sm:$0xf]
    %v534 = vld [vmem:[%s525 + $0x20] sm:$0xf]
    %v535 = vld [vmem:[%s525 + $0x24] sm:$0xf]
    %v536 = vld [vmem:[%s525 + $0x28] sm:$0xf]
    %v537 = vld [vmem:[%s525 + $0x2c] sm:$0xf]
    %v538 = vld [vmem:[%s525 + $0x30] sm:$0xf]
    %v539 = vld [vmem:[%s525 + $0x34] sm:$0xf]
    %v540 = vld [vmem:[%s525 + $0x38] sm:$0xf]
    %v541 = vld [vmem:[%s525 + $0x3c] sm:$0xf]
    %v542 = vld [vmem:[%s525 + $0x40] sm:$0xf]
    %v543 = vld [vmem:[%s525 + $0x44] sm:$0xf]
    %v544 = vld [vmem:[%s525 + $0x48] sm:$0xf]
    %v545 = vld [vmem:[%s525 + $0x4c] sm:$0xf]
    %v546 = vld [vmem:[%s525 + $0x50] sm:$0xf]
    %v547 = vld [vmem:[%s525 + $0x54] sm:$0xf]
    %v548 = vld [vmem:[%s525 + $0x58] sm:$0xf]
    %v549 = vld [vmem:[%s525 + $0x5c] sm:$0xf]
    %v550 = vld [vmem:[%s525 + $0x60] sm:$0xf]
    %v551 = vld [vmem:[%s525 + $0x64] sm:$0xf]
    %v552 = vld [vmem:[%s525 + $0x68] sm:$0xf]
    %v553 = vld [vmem:[%s525 + $0x6c] sm:$0xf]
    %v554 = vld [vmem:[%s525 + $0x70] sm:$0xf]
    %v555 = vld [vmem:[%s525 + $0x74] sm:$0xf]
    %v556 = vld [vmem:[%s525 + $0x78] sm:$0xf]
    %v557 = vld [vmem:[%s525 + $0x7c] sm:$0xf]
    %v558 = vld [vmem:[%s525 + $0x80] sm:$0xf]
    %v559 = vld [vmem:[%s525 + $0x84] sm:$0xf]
    %v560 = vld [vmem:[%s525 + $0x88] sm:$0xf]
    %v561 = vld [vmem:[%s525 + $0x8c] sm:$0xf]
    %v562 = vld [vmem:[%s525 + $0x90] sm:$0xf]
    %v563 = vld [vmem:[%s525 + $0x94] sm:$0xf]
    %v564 = vld [vmem:[%s525 + $0x98] sm:$0xf]
    %v565 = vld [vmem:[%s525 + $0x9c] sm:$0xf]
    %v566 = vld [vmem:[%s525 + $0xa0] sm:$0xf]
    %v567 = vld [vmem:[%s525 + $0xa4] sm:$0xf]
    %v568 = vld [vmem:[%s525 + $0xa8] sm:$0xf]
    %v569 = vld [vmem:[%s525 + $0xac] sm:$0xf]
    %v570 = vld [vmem:[%s525 + $0xb0] sm:$0xf]
    %v571 = vld [vmem:[%s525 + $0xb4] sm:$0xf]
    %v572 = vld [vmem:[%s525 + $0xb8] sm:$0xf]
    %v573 = vld [vmem:[%s525 + $0xbc] sm:$0xf]
    %s574 = scalar_lea.vmem [#allocation10], 64
    %v575 = vld [vmem:[%s574] sm:$0xf]
    %v576 = vld [vmem:[%s574 + $0x4] sm:$0xf]
    %v577 = vld [vmem:[%s574 + $0x8] sm:$0xf]
    %v578 = vld [vmem:[%s574 + $0xc] sm:$0xf]
    %v579 = vld [vmem:[%s574 + $0x10] sm:$0xf]
    %v580 = vld [vmem:[%s574 + $0x14] sm:$0xf]
    %v581 = vld [vmem:[%s574 + $0x18] sm:$0xf]
    %v582 = vld [vmem:[%s574 + $0x1c] sm:$0xf]
    %v583 = vld [vmem:[%s574 + $0x20] sm:$0xf]
    %v584 = vld [vmem:[%s574 + $0x24] sm:$0xf]
    %v585 = vld [vmem:[%s574 + $0x28] sm:$0xf]
    %v586 = vld [vmem:[%s574 + $0x2c] sm:$0xf]
    %v587 = vld [vmem:[%s574 + $0x30] sm:$0xf]
    %v588 = vld [vmem:[%s574 + $0x34] sm:$0xf]
    %v589 = vld [vmem:[%s574 + $0x38] sm:$0xf]
    %v590 = vld [vmem:[%s574 + $0x3c] sm:$0xf]
    %s591 = scalar_lea.vmem %s4, 1
    %v592 = vld [vmem:[%s591] sm:$0x1]
    %s593 = scalar_lea.vmem [#allocation11], 1
    %v594 = vld [vmem:[%s593] sm:$0x1]
    %vm597 = vcmask 1041408
    %v598 = vrot.slane %v523, 6
    %v599 = vrot.slane %v524, 6
    %v600 = vsel %vm597, %v598, %v599
    %v603 = vsel %vm597, 0.0, %v598
    %vm604 = vcmask 1045504
    %v605 = vrot.slane %v523, 2
    %v606 = vrot.slane %v524, 2
    %v607 = vsel %vm604, %v605, %v606
    %v610 = vsel %vm604, %v606, 0.0
    %v611 = vpack.c.bf16 %v600, %v603
    %v612 = vpack.c.bf16 %v524, %v523
    %v613 = vpack.c.bf16 %v610, %v607
    %v615 = vperm.slane %v592, 0
    %v665 = vunpack.c.l.b16 %v526
    %v666 = vunpack.c.l.b16 %v527
    %v667 = vunpack.c.l.b16 %v528
    %v668 = vunpack.c.l.b16 %v529
    %v669 = vunpack.c.l.b16 %v530
    %v670 = vunpack.c.l.b16 %v531
    %v671 = vunpack.c.l.b16 %v532
    %v672 = vunpack.c.l.b16 %v533
    %v673 = vunpack.c.l.b16 %v534
    %v674 = vunpack.c.l.b16 %v535
    %v675 = vunpack.c.l.b16 %v536
    %v676 = vunpack.c.l.b16 %v537
    %v677 = vunpack.c.l.b16 %v538
    %v678 = vunpack.c.l.b16 %v539
    %v679 = vunpack.c.l.b16 %v540
    %v680 = vunpack.c.l.b16 %v541
    %v681 = vunpack.c.l.b16 %v542
    %v682 = vunpack.c.l.b16 %v543
    %v683 = vunpack.c.l.b16 %v544
    %v684 = vunpack.c.l.b16 %v545
    %v685 = vunpack.c.l.b16 %v546
    %v686 = vunpack.c.l.b16 %v547
    %v687 = vunpack.c.l.b16 %v548
    %v688 = vunpack.c.l.b16 %v549
    %v689 = vunpack.c.l.b16 %v550
    %v690 = vunpack.c.l.b16 %v551
    %v691 = vunpack.c.l.b16 %v552
    %v692 = vunpack.c.l.b16 %v553
    %v693 = vunpack.c.l.b16 %v554
    %v694 = vunpack.c.l.b16 %v555
    %v695 = vunpack.c.l.b16 %v556
    %v696 = vunpack.c.l.b16 %v557
    %v697 = vunpack.c.l.b16 %v558
    %v698 = vunpack.c.l.b16 %v559
    %v699 = vunpack.c.l.b16 %v560
    %v700 = vunpack.c.l.b16 %v561
    %v701 = vunpack.c.l.b16 %v562
    %v702 = vunpack.c.l.b16 %v563
    %v703 = vunpack.c.l.b16 %v564
    %v704 = vunpack.c.l.b16 %v565
    %v705 = vunpack.c.l.b16 %v566
    %v706 = vunpack.c.l.b16 %v567
    %v707 = vunpack.c.l.b16 %v568
    %v708 = vunpack.c.l.b16 %v569
    %v709 = vunpack.c.l.b16 %v570
    %v710 = vunpack.c.l.b16 %v571
    %v711 = vunpack.c.l.b16 %v572
    %v712 = vunpack.c.l.b16 %v573
    %v713 = vpack.c.b16 %v666, %v665
    %v714 = vpack.c.b16 %v668, %v667
    %v715 = vpack.c.b16 %v670, %v669
    %v716 = vpack.c.b16 %v672, %v671
    %v717 = vpack.c.b16 %v674, %v673
    %v718 = vpack.c.b16 %v676, %v675
    %v719 = vpack.c.b16 %v678, %v677
    %v720 = vpack.c.b16 %v680, %v679
    %v721 = vpack.c.b16 %v682, %v681
    %v722 = vpack.c.b16 %v684, %v683
    %v723 = vpack.c.b16 %v686, %v685
    %v724 = vpack.c.b16 %v688, %v687
    %v725 = vpack.c.b16 %v690, %v689
    %v726 = vpack.c.b16 %v692, %v691
    %v727 = vpack.c.b16 %v694, %v693
    %v728 = vpack.c.b16 %v696, %v695
    %v729 = vpack.c.b16 %v698, %v697
    %v730 = vpack.c.b16 %v700, %v699
    %v731 = vpack.c.b16 %v702, %v701
    %v732 = vpack.c.b16 %v704, %v703
    %v733 = vpack.c.b16 %v706, %v705
    %v734 = vpack.c.b16 %v708, %v707
    %v735 = vpack.c.b16 %v710, %v709
    %v736 = vpack.c.b16 %v712, %v711
    %761 = vmatpush.bf16.msra.mxu0 %v720
    %762 = vmatpush.bf16.msra.mxu0 %v719
    %763 = vmatpush.bf16.msra.mxu0 %v718
    %764 = vmatpush.bf16.msra.mxu0 %v717
    %765 = vmatpush.bf16.msra.mxu0 %v716
    %766 = vmatpush.bf16.msra.mxu0 %v715
    %767 = vmatpush.bf16.msra.mxu0 %v714
    %768 = vmatpush.bf16.msra.mxu0 %v713
    %769 = vmatmul.bf16.gmra.mxu0 %v611
    %v770 = vpop.f32.mrf.mxu0
    %v771 = vadd.f32 %v615, %v770
    %v772 = vpop.f32.mrf.mxu0
    %v773 = vadd.f32 %v615, %v772
    %774 = vdwg.mxu0
    %775 = vmatpush.bf16.msra.mxu0 %v728
    %776 = vmatpush.bf16.msra.mxu0 %v727
    %777 = vmatpush.bf16.msra.mxu0 %v726
    %778 = vmatpush.bf16.msra.mxu0 %v725
    %779 = vmatpush.bf16.msra.mxu0 %v724
    %780 = vmatpush.bf16.msra.mxu0 %v723
    %781 = vmatpush.bf16.msra.mxu0 %v722
    %782 = vmatpush.bf16.msra.mxu0 %v721
    %783 = vmatmul.bf16.gmra.mxu0 %v612
    %v784 = vpop.f32.mrf.mxu0
    %v785 = vadd.f32 %v771, %v784
    %v786 = vpop.f32.mrf.mxu0
    %v787 = vadd.f32 %v773, %v786
    %788 = vdwg.mxu0
    %789 = vmatpush.bf16.msra.mxu0 %v736
    %790 = vmatpush.bf16.msra.mxu0 %v735
    %791 = vmatpush.bf16.msra.mxu0 %v734
    %792 = vmatpush.bf16.msra.mxu0 %v733
    %793 = vmatpush.bf16.msra.mxu0 %v732
    %794 = vmatpush.bf16.msra.mxu0 %v731
    %795 = vmatpush.bf16.msra.mxu0 %v730
    %796 = vmatpush.bf16.msra.mxu0 %v729
    %797 = vmatmul.bf16.gmra.mxu0 %v613
    %v798 = vpop.f32.mrf.mxu0
    %v799 = vadd.f32 %v785, %v798
    %v800 = vpop.f32.mrf.mxu0
    %v801 = vadd.f32 %v787, %v800
    %802 = vdwg.mxu0
    %v803 = vmax.f32 %v799, 0.0
    %v804 = vmax.f32 %v801, 0.0
    %v805 = vpack.c.bf16 %v804, %v803
    %v807 = vperm.slane %v594, 0
    %v825 = vunpack.c.l.b16 %v575
    %v826 = vunpack.c.l.b16 %v576
    %v827 = vunpack.c.l.b16 %v577
    %v828 = vunpack.c.l.b16 %v578
    %v829 = vunpack.c.l.b16 %v579
    %v830 = vunpack.c.l.b16 %v580
    %v831 = vunpack.c.l.b16 %v581
    %v832 = vunpack.c.l.b16 %v582
    %v833 = vunpack.c.l.b16 %v583
    %v834 = vunpack.c.l.b16 %v584
    %v835 = vunpack.c.l.b16 %v585
    %v836 = vunpack.c.l.b16 %v586
    %v837 = vunpack.c.l.b16 %v587
    %v838 = vunpack.c.l.b16 %v588
    %v839 = vunpack.c.l.b16 %v589
    %v840 = vunpack.c.l.b16 %v590
    %v841 = vpack.c.b16 %v826, %v825
    %v842 = vpack.c.b16 %v828, %v827
    %v843 = vpack.c.b16 %v830, %v829
    %v844 = vpack.c.b16 %v832, %v831
    %v845 = vpack.c.b16 %v834, %v833
    %v846 = vpack.c.b16 %v836, %v835
    %v847 = vpack.c.b16 %v838, %v837
    %v848 = vpack.c.b16 %v840, %v839
    %857 = vmatpush.bf16.msra.mxu0 %v848
    %858 = vmatpush.bf16.msra.mxu0 %v847
    %859 = vmatpush.bf16.msra.mxu0 %v846
    %860 = vmatpush.bf16.msra.mxu0 %v845
    %861 = vmatpush.bf16.msra.mxu0 %v844
    %862 = vmatpush.bf16.msra.mxu0 %v843
    %863 = vmatpush.bf16.msra.mxu0 %v842
    %864 = vmatpush.bf16.msra.mxu0 %v841
    %865 = vmatmul.bf16.gmra.mxu0 %v805
    %v866 = vpop.f32.mrf.mxu0
    %v867 = vadd.f32 %v807, %v866
    %v868 = vpop.f32.mrf.mxu0
    %v869 = vadd.f32 %v807, %v868
    %870 = vdwg.mxu0
    %v871 = vadd.f32 %v523, %v867
    %v872 = vadd.f32 %v524, %v869
    %s873 = scalar_lea.vmem [#allocation8], 384
    %v874 = vld [vmem:[%s873] sm:$0xf]
    %v875 = vld [vmem:[%s873 + $0x4] sm:$0xf]
    %v876 = vld [vmem:[%s873 + $0x8] sm:$0xf]
    %v877 = vld [vmem:[%s873 + $0xc] sm:$0xf]
    %v878 = vld [vmem:[%s873 + $0x10] sm:$0xf]
    %v879 = vld [vmem:[%s873 + $0x14] sm:$0xf]
    %v880 = vld [vmem:[%s873 + $0x18] sm:$0xf]
    %v881 = vld [vmem:[%s873 + $0x1c] sm:$0xf]
    %v882 = vld [vmem:[%s873 + $0x20] sm:$0xf]
    %v883 = vld [vmem:[%s873 + $0x24] sm:$0xf]
    %v884 = vld [vmem:[%s873 + $0x28] sm:$0xf]
    %v885 = vld [vmem:[%s873 + $0x2c] sm:$0xf]
    %v886 = vld [vmem:[%s873 + $0x30] sm:$0xf]
    %v887 = vld [vmem:[%s873 + $0x34] sm:$0xf]
    %v888 = vld [vmem:[%s873 + $0x38] sm:$0xf]
    %v889 = vld [vmem:[%s873 + $0x3c] sm:$0xf]
    %v890 = vld [vmem:[%s873 + $0x40] sm:$0xf]
    %v891 = vld [vmem:[%s873 + $0x44] sm:$0xf]
    %v892 = vld [vmem:[%s873 + $0x48] sm:$0xf]
    %v893 = vld [vmem:[%s873 + $0x4c] sm:$0xf]
    %v894 = vld [vmem:[%s873 + $0x50] sm:$0xf]
    %v895 = vld [vmem:[%s873 + $0x54] sm:$0xf]
    %v896 = vld [vmem:[%s873 + $0x58] sm:$0xf]
    %v897 = vld [vmem:[%s873 + $0x5c] sm:$0xf]
    %v898 = vld [vmem:[%s873 + $0x60] sm:$0xf]
    %v899 = vld [vmem:[%s873 + $0x64] sm:$0xf]
    %v900 = vld [vmem:[%s873 + $0x68] sm:$0xf]
    %v901 = vld [vmem:[%s873 + $0x6c] sm:$0xf]
    %v902 = vld [vmem:[%s873 + $0x70] sm:$0xf]
    %v903 = vld [vmem:[%s873 + $0x74] sm:$0xf]
    %v904 = vld [vmem:[%s873 + $0x78] sm:$0xf]
    %v905 = vld [vmem:[%s873 + $0x7c] sm:$0xf]
    %v906 = vld [vmem:[%s873 + $0x80] sm:$0xf]
    %v907 = vld [vmem:[%s873 + $0x84] sm:$0xf]
    %v908 = vld [vmem:[%s873 + $0x88] sm:$0xf]
    %v909 = vld [vmem:[%s873 + $0x8c] sm:$0xf]
    %v910 = vld [vmem:[%s873 + $0x90] sm:$0xf]
    %v911 = vld [vmem:[%s873 + $0x94] sm:$0xf]
    %v912 = vld [vmem:[%s873 + $0x98] sm:$0xf]
    %v913 = vld [vmem:[%s873 + $0x9c] sm:$0xf]
    %v914 = vld [vmem:[%s873 + $0xa0] sm:$0xf]
    %v915 = vld [vmem:[%s873 + $0xa4] sm:$0xf]
    %v916 = vld [vmem:[%s873 + $0xa8] sm:$0xf]
    %v917 = vld [vmem:[%s873 + $0xac] sm:$0xf]
    %v918 = vld [vmem:[%s873 + $0xb0] sm:$0xf]
    %v919 = vld [vmem:[%s873 + $0xb4] sm:$0xf]
    %v920 = vld [vmem:[%s873 + $0xb8] sm:$0xf]
    %v921 = vld [vmem:[%s873 + $0xbc] sm:$0xf]
    %s922 = scalar_lea.vmem [#allocation10], 128
    %v923 = vld [vmem:[%s922] sm:$0xf]
    %v924 = vld [vmem:[%s922 + $0x4] sm:$0xf]
    %v925 = vld [vmem:[%s922 + $0x8] sm:$0xf]
    %v926 = vld [vmem:[%s922 + $0xc] sm:$0xf]
    %v927 = vld [vmem:[%s922 + $0x10] sm:$0xf]
    %v928 = vld [vmem:[%s922 + $0x14] sm:$0xf]
    %v929 = vld [vmem:[%s922 + $0x18] sm:$0xf]
    %v930 = vld [vmem:[%s922 + $0x1c] sm:$0xf]
    %v931 = vld [vmem:[%s922 + $0x20] sm:$0xf]
    %v932 = vld [vmem:[%s922 + $0x24] sm:$0xf]
    %v933 = vld [vmem:[%s922 + $0x28] sm:$0xf]
    %v934 = vld [vmem:[%s922 + $0x2c] sm:$0xf]
    %v935 = vld [vmem:[%s922 + $0x30] sm:$0xf]
    %v936 = vld [vmem:[%s922 + $0x34] sm:$0xf]
    %v937 = vld [vmem:[%s922 + $0x38] sm:$0xf]
    %v938 = vld [vmem:[%s922 + $0x3c] sm:$0xf]
    %s939 = scalar_lea.vmem %s4, 2
    %v940 = vld [vmem:[%s939] sm:$0x1]
    %s941 = scalar_lea.vmem [#allocation11], 2
    %v942 = vld [vmem:[%s941] sm:$0x1]
    %vm945 = vcmask 1043456
    %v946 = vrot.slane %v871, 4
    %v947 = vrot.slane %v872, 4
    %v948 = vsel %vm945, %v946, %v947
    %v951 = vsel %vm945, 0.0, %v946
    %v953 = vsel %vm945, %v947, 0.0
    %v954 = vpack.c.bf16 %v948, %v951
    %v955 = vpack.c.bf16 %v872, %v871
    %v956 = vpack.c.bf16 %v953, %v948
    %v958 = vperm.slane %v940, 0
    %v1008 = vunpack.c.l.b16 %v874
    %v1009 = vunpack.c.l.b16 %v875
    %v1010 = vunpack.c.l.b16 %v876
    %v1011 = vunpack.c.l.b16 %v877
    %v1012 = vunpack.c.l.b16 %v878
    %v1013 = vunpack.c.l.b16 %v879
    %v1014 = vunpack.c.l.b16 %v880
    %v1015 = vunpack.c.l.b16 %v881
    %v1016 = vunpack.c.l.b16 %v882
    %v1017 = vunpack.c.l.b16 %v883
    %v1018 = vunpack.c.l.b16 %v884
    %v1019 = vunpack.c.l.b16 %v885
    %v1020 = vunpack.c.l.b16 %v886
    %v1021 = vunpack.c.l.b16 %v887
    %v1022 = vunpack.c.l.b16 %v888
    %v1023 = vunpack.c.l.b16 %v889
    %v1024 = vunpack.c.l.b16 %v890
    %v1025 = vunpack.c.l.b16 %v891
    %v1026 = vunpack.c.l.b16 %v892
    %v1027 = vunpack.c.l.b16 %v893
    %v1028 = vunpack.c.l.b16 %v894
    %v1029 = vunpack.c.l.b16 %v895
    %v1030 = vunpack.c.l.b16 %v896
    %v1031 = vunpack.c.l.b16 %v897
    %v1032 = vunpack.c.l.b16 %v898
    %v1033 = vunpack.c.l.b16 %v899
    %v1034 = vunpack.c.l.b16 %v900
    %v1035 = vunpack.c.l.b16 %v901
    %v1036 = vunpack.c.l.b16 %v902
    %v1037 = vunpack.c.l.b16 %v903
    %v1038 = vunpack.c.l.b16 %v904
    %v1039 = vunpack.c.l.b16 %v905
    %v1040 = vunpack.c.l.b16 %v906
    %v1041 = vunpack.c.l.b16 %v907
    %v1042 = vunpack.c.l.b16 %v908
    %v1043 = vunpack.c.l.b16 %v909
    %v1044 = vunpack.c.l.b16 %v910
    %v1045 = vunpack.c.l.b16 %v911
    %v1046 = vunpack.c.l.b16 %v912
    %v1047 = vunpack.c.l.b16 %v913
    %v1048 = vunpack.c.l.b16 %v914
    %v1049 = vunpack.c.l.b16 %v915
    %v1050 = vunpack.c.l.b16 %v916
    %v1051 = vunpack.c.l.b16 %v917
    %v1052 = vunpack.c.l.b16 %v918
    %v1053 = vunpack.c.l.b16 %v919
    %v1054 = vunpack.c.l.b16 %v920
    %v1055 = vunpack.c.l.b16 %v921
    %v1056 = vpack.c.b16 %v1009, %v1008
    %v1057 = vpack.c.b16 %v1011, %v1010
    %v1058 = vpack.c.b16 %v1013, %v1012
    %v1059 = vpack.c.b16 %v1015, %v1014
    %v1060 = vpack.c.b16 %v1017, %v1016
    %v1061 = vpack.c.b16 %v1019, %v1018
    %v1062 = vpack.c.b16 %v1021, %v1020
    %v1063 = vpack.c.b16 %v1023, %v1022
    %v1064 = vpack.c.b16 %v1025, %v1024
    %v1065 = vpack.c.b16 %v1027, %v1026
    %v1066 = vpack.c.b16 %v1029, %v1028
    %v1067 = vpack.c.b16 %v1031, %v1030
    %v1068 = vpack.c.b16 %v1033, %v1032
    %v1069 = vpack.c.b16 %v1035, %v1034
    %v1070 = vpack.c.b16 %v1037, %v1036
    %v1071 = vpack.c.b16 %v1039, %v1038
    %v1072 = vpack.c.b16 %v1041, %v1040
    %v1073 = vpack.c.b16 %v1043, %v1042
    %v1074 = vpack.c.b16 %v1045, %v1044
    %v1075 = vpack.c.b16 %v1047, %v1046
    %v1076 = vpack.c.b16 %v1049, %v1048
    %v1077 = vpack.c.b16 %v1051, %v1050
    %v1078 = vpack.c.b16 %v1053, %v1052
    %v1079 = vpack.c.b16 %v1055, %v1054
    %1104 = vmatpush.bf16.msra.mxu0 %v1063
    %1105 = vmatpush.bf16.msra.mxu0 %v1062
    %1106 = vmatpush.bf16.msra.mxu0 %v1061
    %1107 = vmatpush.bf16.msra.mxu0 %v1060
    %1108 = vmatpush.bf16.msra.mxu0 %v1059
    %1109 = vmatpush.bf16.msra.mxu0 %v1058
    %1110 = vmatpush.bf16.msra.mxu0 %v1057
    %1111 = vmatpush.bf16.msra.mxu0 %v1056
    %1112 = vmatmul.bf16.gmra.mxu0 %v954
    %v1113 = vpop.f32.mrf.mxu0
    %v1114 = vadd.f32 %v958, %v1113
    %v1115 = vpop.f32.mrf.mxu0
    %v1116 = vadd.f32 %v958, %v1115
    %1117 = vdwg.mxu0
    %1118 = vmatpush.bf16.msra.mxu0 %v1071
    %1119 = vmatpush.bf16.msra.mxu0 %v1070
    %1120 = vmatpush.bf16.msra.mxu0 %v1069
    %1121 = vmatpush.bf16.msra.mxu0 %v1068
    %1122 = vmatpush.bf16.msra.mxu0 %v1067
    %1123 = vmatpush.bf16.msra.mxu0 %v1066
    %1124 = vmatpush.bf16.msra.mxu0 %v1065
    %1125 = vmatpush.bf16.msra.mxu0 %v1064
    %1126 = vmatmul.bf16.gmra.mxu0 %v955
    %v1127 = vpop.f32.mrf.mxu0
    %v1128 = vadd.f32 %v1114, %v1127
    %v1129 = vpop.f32.mrf.mxu0
    %v1130 = vadd.f32 %v1116, %v1129
    %1131 = vdwg.mxu0
    %1132 = vmatpush.bf16.msra.mxu0 %v1079
    %1133 = vmatpush.bf16.msra.mxu0 %v1078
    %1134 = vmatpush.bf16.msra.mxu0 %v1077
    %1135 = vmatpush.bf16.msra.mxu0 %v1076
    %1136 = vmatpush.bf16.msra.mxu0 %v1075
    %1137 = vmatpush.bf16.msra.mxu0 %v1074
    %1138 = vmatpush.bf16.msra.mxu0 %v1073
    %1139 = vmatpush.bf16.msra.mxu0 %v1072
    %1140 = vmatmul.bf16.gmra.mxu0 %v956
    %v1141 = vpop.f32.mrf.mxu0
    %v1142 = vadd.f32 %v1128, %v1141
    %v1143 = vpop.f32.mrf.mxu0
    %v1144 = vadd.f32 %v1130, %v1143
    %1145 = vdwg.mxu0
    %v1146 = vmax.f32 %v1142, 0.0
    %v1147 = vmax.f32 %v1144, 0.0
    %v1148 = vpack.c.bf16 %v1147, %v1146
    %v1150 = vperm.slane %v942, 0
    %v1168 = vunpack.c.l.b16 %v923
    %v1169 = vunpack.c.l.b16 %v924
    %v1170 = vunpack.c.l.b16 %v925
    %v1171 = vunpack.c.l.b16 %v926
    %v1172 = vunpack.c.l.b16 %v927
    %v1173 = vunpack.c.l.b16 %v928
    %v1174 = vunpack.c.l.b16 %v929
    %v1175 = vunpack.c.l.b16 %v930
    %v1176 = vunpack.c.l.b16 %v931
    %v1177 = vunpack.c.l.b16 %v932
    %v1178 = vunpack.c.l.b16 %v933
    %v1179 = vunpack.c.l.b16 %v934
    %v1180 = vunpack.c.l.b16 %v935
    %v1181 = vunpack.c.l.b16 %v936
    %v1182 = vunpack.c.l.b16 %v937
    %v1183 = vunpack.c.l.b16 %v938
    %v1184 = vpack.c.b16 %v1169, %v1168
    %v1185 = vpack.c.b16 %v1171, %v1170
    %v1186 = vpack.c.b16 %v1173, %v1172
    %v1187 = vpack.c.b16 %v1175, %v1174
    %v1188 = vpack.c.b16 %v1177, %v1176
    %v1189 = vpack.c.b16 %v1179, %v1178
    %v1190 = vpack.c.b16 %v1181, %v1180
    %v1191 = vpack.c.b16 %v1183, %v1182
    %1200 = vmatpush.bf16.msra.mxu0 %v1191
    %1201 = vmatpush.bf16.msra.mxu0 %v1190
    %1202 = vmatpush.bf16.msra.mxu0 %v1189
    %1203 = vmatpush.bf16.msra.mxu0 %v1188
    %1204 = vmatpush.bf16.msra.mxu0 %v1187
    %1205 = vmatpush.bf16.msra.mxu0 %v1186
    %1206 = vmatpush.bf16.msra.mxu0 %v1185
    %1207 = vmatpush.bf16.msra.mxu0 %v1184
    %1208 = vmatmul.bf16.gmra.mxu0 %v1148
    %v1209 = vpop.f32.mrf.mxu0
    %v1210 = vadd.f32 %v1150, %v1209
    %v1211 = vpop.f32.mrf.mxu0
    %v1212 = vadd.f32 %v1150, %v1211
    %1213 = vdwg.mxu0
    %v1214 = vadd.f32 %v871, %v1210
    %v1215 = vadd.f32 %v872, %v1212
    %1216 = vst [vmem:[#allocation13] sm:$0xff] %v1214
    %1217 = vst [vmem:[#allocation13 + $0x8] sm:$0xff] %v1215
    // Predicated region
    $region54: #{tpu_custom_call.1} parent=1 // pred_check
      _
    $region55: #{tpu_custom_call.1} parent=1 // pred_check_branch
      %1219 = sbr.rel (0) target = $region57
    $region56: #{tpu_custom_call.1} parent=1 // pred_region
      %1221 = vsyncadd [#allocation4], 0
      %s1222 = sshll.u32 [#allocation13], 4
      %s1223 = int_to_ptr.vmem [resolvable:$true] %s1222
      %s1224 = sshll.u32 %s7, 4
      %s1225 = int_to_ptr.hbm [resolvable:$true] %s1224
      %1230 = dma.vmem_to_hbm [thread:$0]  %s1223, 256, %s1225, [#allocation4], 128, 128, 8
    $region57: #{tpu_custom_call.1} parent=1 // pred_fallthru
      _
    // Predicated region
    $region58: #{tpu_custom_call.1} parent=1 // pred_check
      _
    $region59: #{tpu_custom_call.1} parent=1 // pred_check_branch
      %1232 = sbr.rel (0) target = $region61
    $region60: #{tpu_custom_call.1} parent=1 // pred_region
      %1234 = dma.done [#allocation4], 256
    $region61: #{tpu_custom_call.1} parent=1 // pred_fallthru
      _
    %1235 = vsyncpa [#allocation3], 1
    %1236 = vsyncpa [#allocation6], 1
    %1237 = vsyncpa [#allocation9], 1
    %1238 = vsyncpa [#allocation12], 1
    %1239 = vsyncpa [#allocation4], 1

</llo_original>
